<compile_context>
chip_gen: v6e
topology: v6e:2x2x1
jax: 0.10.0
libtpu: 0.0.40
codegen_flags: <defaults>
</compile_context>

<pallas_src>
import functools

import jax
import jax.numpy as jnp
import numpy as np
from jax.experimental import pallas as pl
from jax.experimental.pallas import tpu as pltpu


def _round_up(x, m):
    return ((x + m - 1) // m) * m


@functools.lru_cache(maxsize=None)
def _make_basis(N):
    """Weighted irfft basis, concatenated [C | S] -> (M, 2K), computed once with numpy."""
    K = N // 2 + 1
    M = 2 * (K - 1)
    k = np.arange(K, dtype=np.float64)[:, None]
    n = np.arange(M, dtype=np.float64)[None, :]
    w = np.where((np.arange(K) == 0) | (np.arange(K) == K - 1), 1.0, 2.0)[:, None]
    ang = 2.0 * np.pi * k * n / M
    C = (w / M) * np.cos(ang)          # (K, M): multiplies Re(w^k)
    S = -(w / M) * np.sin(ang)         # (K, M): multiplies Im(w^k)
    basis = np.concatenate([C, S], axis=0).T.astype(np.float32)   # (M, 2K)
    return basis


def _make_kernel(emit_hard, emit_soft):
    """Builds the kernel with only the required output refs (trims HBM writeback)."""

    def kernel(z_ref, basis_ref, *refs):
        # ref order: [hard_ref?] [soft_ref?] rl_ref, x_scratch
        refs = list(refs)
        x_ref = refs.pop()                               # (2K, TILE_B) VMEM scratch
        rl_ref = refs.pop()                              # (1, TILE_B)
        soft_ref = refs.pop() if emit_soft else None     # (M, TILE_B)
        hard_ref = refs.pop() if emit_hard else None     # (M, TILE_B)

        K2, TB = x_ref.shape
        K = K2 // 2
        M = basis_ref.shape[0]

        zre = z_ref[pl.ds(0, 1), :]                      # (1, TB)
        zim = z_ref[pl.ds(1, 1), :]                      # (1, TB)

        # ---- radii loss terms: (1 - tanh|z|)^2 (summed outside; padded cols sliced off) ----
        mag = jnp.sqrt(zre * zre + zim * zim)
        tanh_mag = jnp.tanh(mag)
        rl_ref[...] = (1.0 - tanh_mag) ** 2

        # TODO(synk): NormalizedGradient is identity in the forward pass; its custom backward
        # (grad / (1e-7 + |grad|)) has no forward-only Pallas equivalent.

        # ---- unit-disk activation: w = z * tanh|z| / (|z| + eps), then + eps on the real part ----
        # NOTE: exact divide kept on purpose; pl.reciprocal(approx=True) error is amplified
        # ~K-fold through w^(K-1) and would exceed the reference tolerance.
        scale = tanh_mag / (mag + 1e-7)
        wre = zre * scale + 1e-7
        wim = zim * scale

        # ---- complex powers w^k written directly into the (2K, TB) scratch (lane-dense rows) ----
        pre = jnp.ones_like(wre)
        pim = jnp.zeros_like(wim)
        x_ref[pl.ds(0, 1), :] = pre
        x_ref[pl.ds(K, 1), :] = pim
        for k in range(1, K):                            # K = N//2 + 1 is a small static constant
            pre, pim = pre * wre - pim * wim, pre * wim + pim * wre
            x_ref[pl.ds(k, 1), :] = pre
            x_ref[pl.ds(K + k, 1), :] = pim

        # ---- irfft as ONE fused MXU matmul: (M, 2K) @ (2K, TB) -> (M, TB) ----
        soft = jnp.dot(basis_ref[...], x_ref[...], preferred_element_type=jnp.float32)

        if emit_soft:
            soft_ref[...] = soft

        if emit_hard:
            # straight-through forward value: one-hot at the (first) argmax along taps
            nidx = jax.lax.broadcasted_iota(jnp.int32, (M, TB), 0)
            mx = jnp.max(soft, axis=0, keepdims=True)    # (1, TB)
            cand = jnp.where(soft == mx, nidx, M)
            onset = jnp.min(cand, axis=0, keepdims=True) # (1, TB) first argmax
            hard_ref[...] = jnp.where(nidx == onset, 1.0, 0.0).astype(jnp.float32)

    return kernel


def surrogate_delay(z, N, straight_through=True, return_soft=False, tile_b=8192):
    """JAX/Pallas forward of SurrogateDelay. Returns (irs, radii_loss[, soft])."""
    assert jnp.issubdtype(z.dtype, jnp.complexfloating)
    shape = z.shape
    K = N // 2 + 1                 # sin_N
    M = 2 * (K - 1)                # irfft output length

    zf = z.reshape(-1)
    B = int(zf.shape[0])
    TILE_B = min(tile_b, _round_up(max(B, 1), 128))
    B_pad = _round_up(max(B, 1), TILE_B)
    num_tiles = B_pad // TILE_B

    # Pack Re/Im into one (2, B_pad) input: one DMA stream, B on the lane axis.
    zri = jnp.stack([jnp.real(zf), jnp.imag(zf)], axis=0).astype(jnp.float32)
    zri = jnp.pad(zri, ((0, 0), (0, B_pad - B)))

    basis = jnp.asarray(_make_basis(N))                  # (M, 2K), trace-time constant

    want_hard = straight_through
    want_soft = (not straight_through) or return_soft

    out_shape = []
    out_specs = []
    if want_hard:
        out_shape.append(jax.ShapeDtypeStruct((M, B_pad), jnp.float32))
        out_specs.append(pl.BlockSpec((M, TILE_B), lambda i: (0, i)))
    if want_soft:
        out_shape.append(jax.ShapeDtypeStruct((M, B_pad), jnp.float32))
        out_specs.append(pl.BlockSpec((M, TILE_B), lambda i: (0, i)))
    out_shape.append(jax.ShapeDtypeStruct((1, B_pad), jnp.float32))
    out_specs.append(pl.BlockSpec((1, TILE_B), lambda i: (0, i)))

    outs = pl.pallas_call(
        _make_kernel(want_hard, want_soft),
        out_shape=tuple(out_shape),
        grid_spec=pltpu.PrefetchScalarGridSpec(
            num_scalar_prefetch=0,
            grid=(num_tiles,),
            in_specs=[
                pl.BlockSpec((2, TILE_B), lambda i: (0, i)),
                pl.BlockSpec((M, 2 * K), lambda i: (0, 0)),   # resident basis
            ],
            out_specs=tuple(out_specs),
            scratch_shapes=[pltpu.VMEM((2 * K, TILE_B), jnp.float32)],
        ),
        compiler_params=pltpu.CompilerParams(
            dimension_semantics=("parallel",),        # shards tiles across both TCs on v7x
            vmem_limit_bytes=32 * 1024 * 1024,
        ),
    )(zri, basis)

    outs = list(outs)
    rl = outs.pop()
    soft = outs.pop() if want_soft else None
    hard = outs.pop() if want_hard else None

    loss = jnp.sum(rl[0, :B])                        # padded columns excluded by the slice
    picked = hard if straight_through else soft
    irs = picked[:, :B].T.reshape(*shape, M)
    if return_soft:
        return irs, loss, soft[:, :B].T.reshape(*shape, M)
    return irs, loss


def _reference(z, N):
    """Pure-JAX mirror of the PyTorch forward (straight_through=True)."""
    K = N // 2 + 1
    zf = z.reshape(-1)
    mag = jnp.abs(zf)
    loss = jnp.sum((1.0 - jnp.tanh(mag)) ** 2)
    zn = zf * jnp.tanh(mag) / (mag + 1e-7)
    sins = (zn[:, None] + 1e-7) ** jnp.arange(K)[None, :]
    soft = jnp.fft.irfft(sins, axis=-1)
    onset = jnp.argmax(soft, axis=-1)
    hard = jax.nn.one_hot(onset, soft.shape[-1], dtype=soft.dtype)
    return hard.reshape(*z.shape, -1), loss, soft.reshape(*z.shape, -1)


if __name__ == "__main__":
    N = 16                      # FIR length of the surrogate delay
    shape = (2, 4)              # arbitrary input shape of complex frequencies
    key = jax.random.PRNGKey(0)
    kr, ki = jax.random.split(key)
    z = (jax.random.normal(kr, shape, dtype=jnp.float32)
         + 1j * jax.random.normal(ki, shape, dtype=jnp.float32)).astype(jnp.complex64)

    irs, loss, soft = surrogate_delay(z, N, straight_through=True, return_soft=True)
    jax.block_until_ready((irs, loss, soft))

    # default config (hard-only path, no soft writeback) also runs clean
    irs_only, loss_only = surrogate_delay(z, N, straight_through=True, return_soft=False)
    jax.block_until_ready((irs_only, loss_only))

    ref_irs, ref_loss, ref_soft = _reference(z, N)
    np.testing.assert_allclose(np.asarray(soft), np.asarray(ref_soft),
                               rtol=1e-4, atol=1e-4)
    np.testing.assert_allclose(np.asarray(loss), np.asarray(ref_loss),
                               rtol=1e-4, atol=1e-5)
    np.testing.assert_allclose(np.asarray(irs), np.asarray(ref_irs),
                               rtol=0, atol=1e-6)
    np.testing.assert_allclose(np.asarray(irs_only), np.asarray(ref_irs),
                               rtol=0, atol=1e-6)
    assert irs.shape == (*shape, 2 * (N // 2))

    print("KERNEL_OK")
</pallas_src>

<mosaic_0001>
module attributes {stable_mosaic.version = 11 : i64} {
  func.func @kernel(%arg0: i32, %arg1: memref<2x128xf32, #tpu.memory_space<vmem>>, %arg2: memref<16x18xf32, #tpu.memory_space<vmem>>, %arg3: memref<16x128xf32, #tpu.memory_space<vmem>>, %arg4: memref<16x128xf32, #tpu.memory_space<vmem>>, %arg5: memref<1x128xf32, #tpu.memory_space<vmem>>, %arg6: memref<18x128xf32, #tpu.memory_space<vmem>>) attributes {dimension_semantics = [#tpu.dimension_semantics<parallel>], iteration_bounds = array<i64: 1>, scalar_prefetch = 0 : i64, scratch_operands = 1 : i64, tpu.core_type = #tpu.core_type<tc>, window_params = [{transform_indices = @transform_0, window_bounds = array<i64: 2, 128>}, {pipeline_mode = #tpu.pipeline_mode<synchronous>, transform_indices = @transform_1, window_bounds = array<i64: 16, 18>}, {transform_indices = @transform_2, window_bounds = array<i64: 16, 128>}, {transform_indices = @transform_3, window_bounds = array<i64: 16, 128>}, {transform_indices = @transform_4, window_bounds = array<i64: 1, 128>}]} {
    %c0 = arith.constant 0 : index
    %c0_0 = arith.constant 0 : index
    %0 = vector.load %arg1[%c0, %c0_0] : memref<2x128xf32, #tpu.memory_space<vmem>>, vector<1x128xf32>
    %c1 = arith.constant 1 : index
    %c0_1 = arith.constant 0 : index
    %1 = vector.load %arg1[%c1, %c0_1] : memref<2x128xf32, #tpu.memory_space<vmem>>, vector<1x128xf32>
    %2 = arith.mulf %0, %0 : vector<1x128xf32>
    %3 = arith.mulf %1, %1 : vector<1x128xf32>
    %4 = arith.addf %2, %3 : vector<1x128xf32>
    %5 = math.sqrt %4 : vector<1x128xf32>
    %6 = math.tanh %5 : vector<1x128xf32>
    %cst = arith.constant 1.000000e+00 : f32
    %7 = vector.broadcast %cst : f32 to vector<1x128xf32>
    %8 = arith.subf %7, %6 : vector<1x128xf32>
    %9 = arith.mulf %8, %8 : vector<1x128xf32>
    %c0_2 = arith.constant 0 : index
    %c0_3 = arith.constant 0 : index
    %10 = vector.load %arg5[%c0_2, %c0_3] : memref<1x128xf32, #tpu.memory_space<vmem>>, vector<1x128xf32>
    tpu.vector_store %arg5[%c0_2, %c0_3], %9 {strides = array<i32>} : memref<1x128xf32, #tpu.memory_space<vmem>>, vector<1x128xf32>,
    %cst_4 = arith.constant 1.000000e-07 : f32
    %11 = vector.broadcast %cst_4 : f32 to vector<1x128xf32>
    %12 = arith.addf %5, %11 : vector<1x128xf32>
    %13 = arith.divf %6, %12 : vector<1x128xf32>
    %14 = arith.mulf %0, %13 : vector<1x128xf32>
    %cst_5 = arith.constant 1.000000e-07 : f32
    %15 = vector.broadcast %cst_5 : f32 to vector<1x128xf32>
    %16 = arith.addf %14, %15 : vector<1x128xf32>
    %17 = arith.mulf %1, %13 : vector<1x128xf32>
    %cst_6 = arith.constant 1.000000e+00 : f32
    %18 = vector.broadcast %cst_6 : f32 to vector<1x128xf32>
    %cst_7 = arith.constant 0.000000e+00 : f32
    %19 = vector.broadcast %cst_7 : f32 to vector<1x128xf32>
    %c0_8 = arith.constant 0 : index
    %c0_9 = arith.constant 0 : index
    %20 = vector.load %arg6[%c0_8, %c0_9] : memref<18x128xf32, #tpu.memory_space<vmem>>, vector<1x128xf32>
    tpu.vector_store %arg6[%c0_8, %c0_9], %18 {strides = array<i32>} : memref<18x128xf32, #tpu.memory_space<vmem>>, vector<1x128xf32>,
    %c9 = arith.constant 9 : index
    %c0_10 = arith.constant 0 : index
    %21 = vector.load %arg6[%c9, %c0_10] : memref<18x128xf32, #tpu.memory_space<vmem>>, vector<1x128xf32>
    tpu.vector_store %arg6[%c9, %c0_10], %19 {strides = array<i32>} : memref<18x128xf32, #tpu.memory_space<vmem>>, vector<1x128xf32>,
    %22 = arith.mulf %18, %16 : vector<1x128xf32>
    %23 = arith.mulf %19, %17 : vector<1x128xf32>
    %24 = arith.subf %22, %23 : vector<1x128xf32>
    %25 = arith.mulf %18, %17 : vector<1x128xf32>
    %26 = arith.mulf %19, %16 : vector<1x128xf32>
    %27 = arith.addf %25, %26 : vector<1x128xf32>
    %c1_11 = arith.constant 1 : index
    %c0_12 = arith.constant 0 : index
    %28 = vector.load %arg6[%c1_11, %c0_12] : memref<18x128xf32, #tpu.memory_space<vmem>>, vector<1x128xf32>
    tpu.vector_store %arg6[%c1_11, %c0_12], %24 {strides = array<i32>} : memref<18x128xf32, #tpu.memory_space<vmem>>, vector<1x128xf32>,
    %c10 = arith.constant 10 : index
    %c0_13 = arith.constant 0 : index
    %29 = vector.load %arg6[%c10, %c0_13] : memref<18x128xf32, #tpu.memory_space<vmem>>, vector<1x128xf32>
    tpu.vector_store %arg6[%c10, %c0_13], %27 {strides = array<i32>} : memref<18x128xf32, #tpu.memory_space<vmem>>, vector<1x128xf32>,
    %30 = arith.mulf %24, %16 : vector<1x128xf32>
    %31 = arith.mulf %27, %17 : vector<1x128xf32>
    %32 = arith.subf %30, %31 : vector<1x128xf32>
    %33 = arith.mulf %24, %17 : vector<1x128xf32>
    %34 = arith.mulf %27, %16 : vector<1x128xf32>
    %35 = arith.addf %33, %34 : vector<1x128xf32>
    %c2 = arith.constant 2 : index
    %c0_14 = arith.constant 0 : index
    %36 = vector.load %arg6[%c2, %c0_14] : memref<18x128xf32, #tpu.memory_space<vmem>>, vector<1x128xf32>
    tpu.vector_store %arg6[%c2, %c0_14], %32 {strides = array<i32>} : memref<18x128xf32, #tpu.memory_space<vmem>>, vector<1x128xf32>,
    %c11 = arith.constant 11 : index
    %c0_15 = arith.constant 0 : index
    %37 = vector.load %arg6[%c11, %c0_15] : memref<18x128xf32, #tpu.memory_space<vmem>>, vector<1x128xf32>
    tpu.vector_store %arg6[%c11, %c0_15], %35 {strides = array<i32>} : memref<18x128xf32, #tpu.memory_space<vmem>>, vector<1x128xf32>,
    %38 = arith.mulf %32, %16 : vector<1x128xf32>
    %39 = arith.mulf %35, %17 : vector<1x128xf32>
    %40 = arith.subf %38, %39 : vector<1x128xf32>
    %41 = arith.mulf %32, %17 : vector<1x128xf32>
    %42 = arith.mulf %35, %16 : vector<1x128xf32>
    %43 = arith.addf %41, %42 : vector<1x128xf32>
    %c3 = arith.constant 3 : index
    %c0_16 = arith.constant 0 : index
    %44 = vector.load %arg6[%c3, %c0_16] : memref<18x128xf32, #tpu.memory_space<vmem>>, vector<1x128xf32>
    tpu.vector_store %arg6[%c3, %c0_16], %40 {strides = array<i32>} : memref<18x128xf32, #tpu.memory_space<vmem>>, vector<1x128xf32>,
    %c12 = arith.constant 12 : index
    %c0_17 = arith.constant 0 : index
    %45 = vector.load %arg6[%c12, %c0_17] : memref<18x128xf32, #tpu.memory_space<vmem>>, vector<1x128xf32>
    tpu.vector_store %arg6[%c12, %c0_17], %43 {strides = array<i32>} : memref<18x128xf32, #tpu.memory_space<vmem>>, vector<1x128xf32>,
    %46 = arith.mulf %40, %16 : vector<1x128xf32>
    %47 = arith.mulf %43, %17 : vector<1x128xf32>
    %48 = arith.subf %46, %47 : vector<1x128xf32>
    %49 = arith.mulf %40, %17 : vector<1x128xf32>
    %50 = arith.mulf %43, %16 : vector<1x128xf32>
    %51 = arith.addf %49, %50 : vector<1x128xf32>
    %c4 = arith.constant 4 : index
    %c0_18 = arith.constant 0 : index
    %52 = vector.load %arg6[%c4, %c0_18] : memref<18x128xf32, #tpu.memory_space<vmem>>, vector<1x128xf32>
    tpu.vector_store %arg6[%c4, %c0_18], %48 {strides = array<i32>} : memref<18x128xf32, #tpu.memory_space<vmem>>, vector<1x128xf32>,
    %c13 = arith.constant 13 : index
    %c0_19 = arith.constant 0 : index
    %53 = vector.load %arg6[%c13, %c0_19] : memref<18x128xf32, #tpu.memory_space<vmem>>, vector<1x128xf32>
    tpu.vector_store %arg6[%c13, %c0_19], %51 {strides = array<i32>} : memref<18x128xf32, #tpu.memory_space<vmem>>, vector<1x128xf32>,
    %54 = arith.mulf %48, %16 : vector<1x128xf32>
    %55 = arith.mulf %51, %17 : vector<1x128xf32>
    %56 = arith.subf %54, %55 : vector<1x128xf32>
    %57 = arith.mulf %48, %17 : vector<1x128xf32>
    %58 = arith.mulf %51, %16 : vector<1x128xf32>
    %59 = arith.addf %57, %58 : vector<1x128xf32>
    %c5 = arith.constant 5 : index
    %c0_20 = arith.constant 0 : index
    %60 = vector.load %arg6[%c5, %c0_20] : memref<18x128xf32, #tpu.memory_space<vmem>>, vector<1x128xf32>
    tpu.vector_store %arg6[%c5, %c0_20], %56 {strides = array<i32>} : memref<18x128xf32, #tpu.memory_space<vmem>>, vector<1x128xf32>,
    %c14 = arith.constant 14 : index
    %c0_21 = arith.constant 0 : index
    %61 = vector.load %arg6[%c14, %c0_21] : memref<18x128xf32, #tpu.memory_space<vmem>>, vector<1x128xf32>
    tpu.vector_store %arg6[%c14, %c0_21], %59 {strides = array<i32>} : memref<18x128xf32, #tpu.memory_space<vmem>>, vector<1x128xf32>,
    %62 = arith.mulf %56, %16 : vector<1x128xf32>
    %63 = arith.mulf %59, %17 : vector<1x128xf32>
    %64 = arith.subf %62, %63 : vector<1x128xf32>
    %65 = arith.mulf %56, %17 : vector<1x128xf32>
    %66 = arith.mulf %59, %16 : vector<1x128xf32>
    %67 = arith.addf %65, %66 : vector<1x128xf32>
    %c6 = arith.constant 6 : index
    %c0_22 = arith.constant 0 : index
    %68 = vector.load %arg6[%c6, %c0_22] : memref<18x128xf32, #tpu.memory_space<vmem>>, vector<1x128xf32>
    tpu.vector_store %arg6[%c6, %c0_22], %64 {strides = array<i32>} : memref<18x128xf32, #tpu.memory_space<vmem>>, vector<1x128xf32>,
    %c15 = arith.constant 15 : index
    %c0_23 = arith.constant 0 : index
    %69 = vector.load %arg6[%c15, %c0_23] : memref<18x128xf32, #tpu.memory_space<vmem>>, vector<1x128xf32>
    tpu.vector_store %arg6[%c15, %c0_23], %67 {strides = array<i32>} : memref<18x128xf32, #tpu.memory_space<vmem>>, vector<1x128xf32>,
    %70 = arith.mulf %64, %16 : vector<1x128xf32>
    %71 = arith.mulf %67, %17 : vector<1x128xf32>
    %72 = arith.subf %70, %71 : vector<1x128xf32>
    %73 = arith.mulf %64, %17 : vector<1x128xf32>
    %74 = arith.mulf %67, %16 : vector<1x128xf32>
    %75 = arith.addf %73, %74 : vector<1x128xf32>
    %c7 = arith.constant 7 : index
    %c0_24 = arith.constant 0 : index
    %76 = vector.load %arg6[%c7, %c0_24] : memref<18x128xf32, #tpu.memory_space<vmem>>, vector<1x128xf32>
    tpu.vector_store %arg6[%c7, %c0_24], %72 {strides = array<i32>} : memref<18x128xf32, #tpu.memory_space<vmem>>, vector<1x128xf32>,
    %c16 = arith.constant 16 : index
    %c0_25 = arith.constant 0 : index
    %77 = vector.load %arg6[%c16, %c0_25] : memref<18x128xf32, #tpu.memory_space<vmem>>, vector<1x128xf32>
    tpu.vector_store %arg6[%c16, %c0_25], %75 {strides = array<i32>} : memref<18x128xf32, #tpu.memory_space<vmem>>, vector<1x128xf32>,
    %78 = arith.mulf %72, %16 : vector<1x128xf32>
    %79 = arith.mulf %75, %17 : vector<1x128xf32>
    %80 = arith.subf %78, %79 : vector<1x128xf32>
    %81 = arith.mulf %72, %17 : vector<1x128xf32>
    %82 = arith.mulf %75, %16 : vector<1x128xf32>
    %83 = arith.addf %81, %82 : vector<1x128xf32>
    %c8 = arith.constant 8 : index
    %c0_26 = arith.constant 0 : index
    %84 = vector.load %arg6[%c8, %c0_26] : memref<18x128xf32, #tpu.memory_space<vmem>>, vector<1x128xf32>
    tpu.vector_store %arg6[%c8, %c0_26], %80 {strides = array<i32>} : memref<18x128xf32, #tpu.memory_space<vmem>>, vector<1x128xf32>,
    %c17 = arith.constant 17 : index
    %c0_27 = arith.constant 0 : index
    %85 = vector.load %arg6[%c17, %c0_27] : memref<18x128xf32, #tpu.memory_space<vmem>>, vector<1x128xf32>
    tpu.vector_store %arg6[%c17, %c0_27], %83 {strides = array<i32>} : memref<18x128xf32, #tpu.memory_space<vmem>>, vector<1x128xf32>,
    %c0_28 = arith.constant 0 : index
    %c0_29 = arith.constant 0 : index
    %86 = vector.load %arg2[%c0_28, %c0_29] : memref<16x18xf32, #tpu.memory_space<vmem>>, vector<16x18xf32>
    %c0_30 = arith.constant 0 : index
    %c0_31 = arith.constant 0 : index
    %87 = vector.load %arg6[%c0_30, %c0_31] : memref<18x128xf32, #tpu.memory_space<vmem>>, vector<18x128xf32>
    %cst_32 = arith.constant dense<0.000000e+00> : vector<16x128xf32>
    %88 = tpu.matmul %86, %87, %cst_32 {dimension_numbers = #tpu.dot_dimension_numbers<[1], [0], [0], [1], [0, 0, 1, 1], [], []>} : vector<16x18xf32>, vector<18x128xf32>, vector<16x128xf32> -> vector<16x128xf32>
    %c0_33 = arith.constant 0 : index
    %c0_34 = arith.constant 0 : index
    %89 = vector.load %arg4[%c0_33, %c0_34] : memref<16x128xf32, #tpu.memory_space<vmem>>, vector<16x128xf32>
    tpu.vector_store %arg4[%c0_33, %c0_34], %88 {strides = array<i32>} : memref<16x128xf32, #tpu.memory_space<vmem>>, vector<16x128xf32>,
    %90 = tpu.iota {dimensions = array<i32: 0>} : vector<16x128xi32>
    %cst_35 = arith.constant dense<0xFF800000> : vector<128xf32>
    %91 = vector.multi_reduction <maximumf>, %88, %cst_35 [0] : vector<16x128xf32> to vector<128xf32>
    %92 = vector.shape_cast %91 : vector<128xf32> to vector<1x128xf32>
    %93 = vector.broadcast %92 : vector<1x128xf32> to vector<16x128xf32>
    %94 = arith.cmpf oeq, %88, %93 : vector<16x128xf32>
    %c16_i32 = arith.constant 16 : i32
    %95 = vector.broadcast %c16_i32 : i32 to vector<16x128xi32>
    %96 = arith.select %94, %90, %95 : vector<16x128xi1>, vector<16x128xi32>
    %cst_36 = arith.constant dense<2147483647> : vector<128xi32>
    %97 = vector.multi_reduction <minsi>, %96, %cst_36 [0] : vector<16x128xi32> to vector<128xi32>
    %98 = vector.shape_cast %97 : vector<128xi32> to vector<1x128xi32>
    %99 = vector.broadcast %98 : vector<1x128xi32> to vector<16x128xi32>
    %100 = arith.cmpi eq, %90, %99 : vector<16x128xi32>
    %cst_37 = arith.constant 1.000000e+00 : f32
    %cst_38 = arith.constant 0.000000e+00 : f32
    %101 = vector.broadcast %cst_37 : f32 to vector<16x128xf32>
    %102 = vector.broadcast %cst_38 : f32 to vector<16x128xf32>
    %103 = arith.select %100, %101, %102 : vector<16x128xi1>, vector<16x128xf32>
    %c0_39 = arith.constant 0 : index
    %c0_40 = arith.constant 0 : index
    %104 = vector.load %arg3[%c0_39, %c0_40] : memref<16x128xf32, #tpu.memory_space<vmem>>, vector<16x128xf32>
    tpu.vector_store %arg3[%c0_39, %c0_40], %103 {strides = array<i32>} : memref<16x128xf32, #tpu.memory_space<vmem>>, vector<16x128xf32>,
    return
  }
  func.func @transform_0(%arg0: i32) -> (i32, i32) {
    %c0_i32 = arith.constant 0 : i32
    %c0_i32_0 = arith.constant 0 : i32
    return %c0_i32, %arg0 : i32, i32
  }
  func.func @transform_1(%arg0: i32) -> (i32, i32) {
    %c0_i32 = arith.constant 0 : i32
    %c0_i32_0 = arith.constant 0 : i32
    %c0_i32_1 = arith.constant 0 : i32
    return %c0_i32, %c0_i32_0 : i32, i32
  }
  func.func @transform_2(%arg0: i32) -> (i32, i32) {
    %c0_i32 = arith.constant 0 : i32
    %c0_i32_0 = arith.constant 0 : i32
    return %c0_i32, %arg0 : i32, i32
  }
  func.func @transform_3(%arg0: i32) -> (i32, i32) {
    %c0_i32 = arith.constant 0 : i32
    %c0_i32_0 = arith.constant 0 : i32
    return %c0_i32, %arg0 : i32, i32
  }
  func.func @transform_4(%arg0: i32) -> (i32, i32) {
    %c0_i32 = arith.constant 0 : i32
    %c0_i32_0 = arith.constant 0 : i32
    return %c0_i32, %arg0 : i32, i32
  }
}

</mosaic_0001>

<llo_original>
// kernel: tpu_custom_call.1
$region0: #{tpu_custom_call.1}
  #allocation0 [shape = 'u32[]', space=smem, size = 0x4, offset = 0x4, fixed_abs, tag = 'smem constant byte address 0x4 - core index']
  #allocation1 [shape = 'u32[144,128]{1,0:T(1,128)}', space=vmem, size = 0x12000, scoped, tag = 'internal scratch']
  #allocation2 [shape = 'f32[18,128]{1,0:T(8,128)}', space=vmem, size = 0x3000, scoped, tag = 'scratch operand']
  %s0 = inlined_call_operand.hbm [shape: f32[2,128], index: 0, kind: input, shape index: {}]
  %s1 = inlined_call_operand.hbm [shape: f32[16,18], index: 1, kind: input, shape index: {}]
  %s2 = inlined_call_operand.hbm [shape: f32[16,128], index: 2, kind: output, shape index: {0}]
  %s3 = inlined_call_operand.hbm [shape: f32[16,128], index: 3, kind: output, shape index: {1}]
  %s4 = inlined_call_operand.hbm [shape: f32[1,128], index: 4, kind: output, shape index: {2}]
  %5 = xla_tuple %s2, %s3, %s4
  %s6 = sld [smem:[#allocation0]]
  $region42: #{tpu_custom_call.1} parent=0
    _
  %s8 = ssub.s32 1, %s6
  %s9 = scalar_select 0, %s8, %s6
  $region1: #{tpu_custom_call.1} parent=0
    #allocation3 [shape = 'u8[1024]{0}', space=vmem, size = 0x400, scoped, tag = 'input window, operand 0, single buffered']
    #allocation4 [shape = 's32[1]{0}', space=sflag, size = 0x4, scoped, tag = 'scoped memory for tpu_custom_call.1']
    #allocation5 [shape = 's32[1]{0}', space=sflag, size = 0x4, scoped, tag = 'scoped memory for tpu_custom_call.1']
    #allocation6 [shape = 'u8[8192]{0}', space=vmem, size = 0x2000, scoped, tag = 'input window, operand 1, single buffered']
    #allocation7 [shape = 's32[1]{0}', space=sflag, size = 0x4, scoped, tag = 'scoped memory for tpu_custom_call.1']
    #allocation8 [shape = 'u8[8192]{0}', space=vmem, size = 0x2000, scoped, tag = 'output window, operand 0, single buffered']
    #allocation9 [shape = 'u8[8192]{0}', space=vmem, size = 0x2000, scoped, tag = 'output window, operand 1, single buffered']
    #allocation10 [shape = 's32[1]{0}', space=sflag, size = 0x4, scoped, tag = 'scoped memory for tpu_custom_call.1']
    #allocation11 [shape = 'u8[512]{0}', space=vmem, size = 0x400, scoped, tag = 'output window, operand 2, single buffered']
    %10 = vsyncpa [#allocation4], 0
    %11 = vsyncpa [#allocation7], 0
    %12 = vsyncpa [#allocation5], 0
    %13 = vsyncpa [#allocation10], 0
    // Predicated region
    $region2: #{tpu_custom_call.1} parent=1 // pred_check
      _
    $region3: #{tpu_custom_call.1} parent=1 // pred_check_branch
      %15 = sbr.rel (0) target = $region5
    $region4: #{tpu_custom_call.1} parent=1 // pred_region
      %s17 = ssub.s32 32, 32
      %18 = vsyncadd [#allocation4], %s17
      %s20 = sshll.u32 [#allocation3], 4
      %s21 = int_to_ptr.vmem [resolvable:$true] %s20
      %23 = dma.hbm_to_vmem [thread:$0]  %s0, 32, %s21, [#allocation4]
    $region5: #{tpu_custom_call.1} parent=1 // pred_fallthru
      _
    // Predicated region
    $region6: #{tpu_custom_call.1} parent=1 // pred_check
      _
    $region7: #{tpu_custom_call.1} parent=1 // pred_check_branch
      %25 = sbr.rel (0) target = $region9
    $region8: #{tpu_custom_call.1} parent=1 // pred_region
      %s27 = ssub.s32 256, 256
      %28 = vsyncadd [#allocation7], %s27
      %s29 = sshll.u32 [#allocation6], 4
      %s30 = int_to_ptr.vmem [resolvable:$true] %s29
      %35 = dma.hbm_to_vmem [thread:$0]  %s1, 256, %s30, [#allocation7], 128, 128, 8
    $region9: #{tpu_custom_call.1} parent=1 // pred_fallthru
      _
    // Predicated region
    $region10: #{tpu_custom_call.1} parent=1 // pred_check
      _
    $region11: #{tpu_custom_call.1} parent=1 // pred_check_branch
      %37 = sbr.rel (0) target = $region13
    $region12: #{tpu_custom_call.1} parent=1 // pred_region
      %38 = dma.done [#allocation4], 32
    $region13: #{tpu_custom_call.1} parent=1 // pred_fallthru
      _
    // Predicated region
    $region14: #{tpu_custom_call.1} parent=1 // pred_check
      _
    $region15: #{tpu_custom_call.1} parent=1 // pred_check_branch
      %40 = sbr.rel (0) target = $region17
    $region16: #{tpu_custom_call.1} parent=1 // pred_region
      %41 = dma.done [#allocation7], 256
    $region17: #{tpu_custom_call.1} parent=1 // pred_fallthru
      _
    %v42 = vld [vmem:[#allocation3] sm:$0x1]
    %v43 = vld [vmem:[#allocation3 + $0x1] sm:$0x1]
    %v44 = vmul.f32 %v42, %v42
    %v45 = vmul.f32 %v43, %v43
    %v46 = vadd.f32 %v44, %v45
    %v47 = vrsqrt.pop %v46
    %v48 = vmul.f32 %v46, %v47
    %vm49 = vcmp.eq.f32.partialorder %v46, inf
    %v50 = vsel %vm49, %v46, %v48
    %vm51 = vcmp.eq.f32.partialorder %v46, 0.0
    %v52 = vand.u32 %v46, 2147483648
    %v53 = vsel %vm51, %v52, %v50
    %v54 = vtanh.pop %v53
    %v55 = vsub.f32 1.0, %v54
    %v56 = vmul.f32 %v55, %v55
    %57 = vst [vmem:[#allocation11] sm:$0x1] %v56
    %v58 = vadd.f32 %v53, 1e-07
    %v59 = vrcp.pop %v58
    %v60 = vmul.f32 %v54, %v59
    %v61 = vmul.f32 %v42, %v60
    %v62 = vadd.f32 %v61, 1e-07
    %v63 = vmul.f32 %v43, %v60
    %64 = vst [vmem:[#allocation2] sm:$0x1] 1.0
    %65 = vst [vmem:[#allocation2 + $0x9] sm:$0x1] 0.0
    %v66 = vmul.f32 %v63, 0.0
    %v67 = vsub.f32 %v62, %v66
    %v68 = vmul.f32 %v62, 0.0
    %v69 = vadd.f32 %v63, %v68
    %70 = vst [vmem:[#allocation2 + $0x1] sm:$0x1] %v67
    %71 = vst [vmem:[#allocation2 + $0xa] sm:$0x1] %v69
    %v72 = vmul.f32 %v67, %v62
    %v73 = vmul.f32 %v69, %v63
    %v74 = vsub.f32 %v72, %v73
    %v75 = vmul.f32 %v67, %v63
    %v76 = vmul.f32 %v69, %v62
    %v77 = vadd.f32 %v75, %v76
    %78 = vst [vmem:[#allocation2 + $0x2] sm:$0x1] %v74
    %79 = vst [vmem:[#allocation2 + $0xb] sm:$0x1] %v77
    %v80 = vmul.f32 %v74, %v62
    %v81 = vmul.f32 %v77, %v63
    %v82 = vsub.f32 %v80, %v81
    %v83 = vmul.f32 %v74, %v63
    %v84 = vmul.f32 %v77, %v62
    %v85 = vadd.f32 %v83, %v84
    %86 = vst [vmem:[#allocation2 + $0x3] sm:$0x1] %v82
    %87 = vst [vmem:[#allocation2 + $0xc] sm:$0x1] %v85
    %v88 = vmul.f32 %v82, %v62
    %v89 = vmul.f32 %v85, %v63
    %v90 = vsub.f32 %v88, %v89
    %v91 = vmul.f32 %v82, %v63
    %v92 = vmul.f32 %v85, %v62
    %v93 = vadd.f32 %v91, %v92
    %94 = vst [vmem:[#allocation2 + $0x4] sm:$0x1] %v90
    %95 = vst [vmem:[#allocation2 + $0xd] sm:$0x1] %v93
    %v96 = vmul.f32 %v90, %v62
    %v97 = vmul.f32 %v93, %v63
    %v98 = vsub.f32 %v96, %v97
    %v99 = vmul.f32 %v90, %v63
    %v100 = vmul.f32 %v93, %v62
    %v101 = vadd.f32 %v99, %v100
    %102 = vst [vmem:[#allocation2 + $0x5] sm:$0x1] %v98
    %103 = vst [vmem:[#allocation2 + $0xe] sm:$0x1] %v101
    %v104 = vmul.f32 %v98, %v62
    %v105 = vmul.f32 %v101, %v63
    %v106 = vsub.f32 %v104, %v105
    %v107 = vmul.f32 %v98, %v63
    %v108 = vmul.f32 %v101, %v62
    %v109 = vadd.f32 %v107, %v108
    %110 = vst [vmem:[#allocation2 + $0x6] sm:$0x1] %v106
    %111 = vst [vmem:[#allocation2 + $0xf] sm:$0x1] %v109
    %v112 = vmul.f32 %v106, %v62
    %v113 = vmul.f32 %v109, %v63
    %v114 = vsub.f32 %v112, %v113
    %v115 = vmul.f32 %v106, %v63
    %v116 = vmul.f32 %v109, %v62
    %v117 = vadd.f32 %v115, %v116
    %118 = vst [vmem:[#allocation2 + $0x7] sm:$0x1] %v114
    %119 = vst [vmem:[#allocation2 + $0x10] sm:$0x1] %v117
    %v120 = vmul.f32 %v114, %v62
    %v121 = vmul.f32 %v117, %v63
    %v122 = vsub.f32 %v120, %v121
    %v123 = vmul.f32 %v114, %v63
    %v124 = vmul.f32 %v117, %v62
    %v125 = vadd.f32 %v123, %v124
    %126 = vst [vmem:[#allocation2 + $0x8] sm:$0x1] %v122
    %127 = vst [vmem:[#allocation2 + $0x11] sm:$0x1] %v125
    %v128 = vld [vmem:[#allocation6] sm:$0xff]
    %v129 = vld [vmem:[#allocation6 + $0x8] sm:$0xff]
    %v130 = vld [vmem:[#allocation2] sm:$0xff]
    %v131 = vld [vmem:[#allocation2 + $0x8] sm:$0xff]
    %v132 = vld [vmem:[#allocation2 + $0x10] sm:$0x3]
    %vm133 = vcmask 146432
    %v135 = vsel %vm133, %v128, 0
    %v138 = vsel %vm133, %v129, 0
    %vm140 = vcmask 1041408
    %v142 = vsel %vm140, %v132, 0
    %144 = vmatprep.subr.mxu0 0.0
    %145 = vmatpush1.msra.mxu0 0.0
    %146 = vmatprep.subr.mxu0 0.0
    %147 = vmatpush1.msra.mxu0 0.0
    %148 = vmatprep.subr.mxu0 0.0
    %149 = vmatpush1.msra.mxu0 0.0
    %150 = vmatprep.subr.mxu0 0.0
    %151 = vmatpush1.msra.mxu0 0.0
    %152 = vmatprep.subr.mxu0 0.0
    %153 = vmatpush1.msra.mxu0 0.0
    %154 = vmatprep.subr.mxu0 0.0
    %155 = vmatpush1.msra.mxu0 0.0
    %156 = vmatprep.subr.mxu0 0.0
    %157 = vmatpush1.msra.mxu0 0.0
    %158 = vmatprep.subr.mxu0 0.0
    %159 = vmatpush1.msra.mxu0 0.0
    %160 = vmatprep.subr.mxu0 0.0
    %161 = vmatpush1.msra.mxu0 0.0
    %162 = vmatprep.subr.mxu0 0.0
    %163 = vmatpush1.msra.mxu0 0.0
    %164 = vmatprep.subr.mxu0 0.0
    %165 = vmatpush1.msra.mxu0 0.0
    %166 = vmatprep.subr.mxu0 0.0
    %167 = vmatpush1.msra.mxu0 0.0
    %168 = vmatprep.subr.mxu0 0.0
    %169 = vmatpush1.msra.mxu0 0.0
    %170 = vmatprep.subr.mxu0 0.0
    %171 = vmatpush1.msra.mxu0 %v142
    %172 = vmatprep.subr.mxu0 0.0
    %173 = vmatpush1.msra.mxu0 %v131
    %174 = vmatprep.subr.mxu0 0.0
    %175 = vmatpush1.msra.mxu0 %v130
    %176 = vmatprep.subr.mxu0 0.0
    %177 = vmatpush2.msra.mxu0 0.0
    %178 = vmatprep.subr.mxu0 0.0
    %179 = vmatpush2.msra.mxu0 0.0
    %180 = vmatprep.subr.mxu0 0.0
    %181 = vmatpush2.msra.mxu0 0.0
    %182 = vmatprep.subr.mxu0 0.0
    %183 = vmatpush2.msra.mxu0 0.0
    %184 = vmatprep.subr.mxu0 0.0
    %185 = vmatpush2.msra.mxu0 0.0
    %186 = vmatprep.subr.mxu0 0.0
    %187 = vmatpush2.msra.mxu0 0.0
    %188 = vmatprep.subr.mxu0 0.0
    %189 = vmatpush2.msra.mxu0 0.0
    %190 = vmatprep.subr.mxu0 0.0
    %191 = vmatpush2.msra.mxu0 0.0
    %192 = vmatprep.subr.mxu0 0.0
    %193 = vmatpush2.msra.mxu0 0.0
    %194 = vmatprep.subr.mxu0 0.0
    %195 = vmatpush2.msra.mxu0 0.0
    %196 = vmatprep.subr.mxu0 0.0
    %197 = vmatpush2.msra.mxu0 0.0
    %198 = vmatprep.subr.mxu0 0.0
    %199 = vmatpush2.msra.mxu0 0.0
    %200 = vmatprep.subr.mxu0 0.0
    %201 = vmatpush2.msra.mxu0 0.0
    %202 = vmatprep.subr.mxu0 0.0
    %203 = vmatpush2.msra.mxu0 0.0
    %204 = vmatprep.subr.mxu0 0.0
    %205 = vmatpush2.msra.mxu0 0.0
    %206 = vmatprep.subr.mxu0 0.0
    %207 = vmatpush2.msra.mxu0 0.0
    %208 = vmatprep.mubr.f32.mxu0 0.0
    %209 = vmatmul.mubr.f32.gmra.mxu0 %v135
    %v210 = vpop.f32.mrf.mxu0
    %v211 = vadd.f32 0.0, %v210
    %v212 = vpop.f32.mrf.mxu0
    %213 = vmatprep.mubr.f32.mxu0 0.0
    %214 = vmatmul.mubr.f32.gmra.mxu0 %v138
    %v215 = vpop.f32.mrf.mxu0
    %v216 = vadd.f32 0.0, %v215
    %v217 = vpop.f32.mrf.mxu0
    %218 = vdwg.mxu0
    %219 = vst [vmem:[#allocation9] sm:$0xff] %v211
    %220 = vst [vmem:[#allocation9 + $0x8] sm:$0xff] %v216
    %v221 = vlaneseq
    %v222 = vshrl.u32 %v221, 7
    %v223 = vadd.s32 %v222, 8
    %v224 = vmax.f32 %v211, %v216
    %v225 = vrot.slane %v224, 4
    %v226 = vmax.f32 %v224, %v225
    %v227 = vrot.slane %v226, 2
    %v228 = vmax.f32 %v226, %v227
    %v229 = vrot.slane %v228, 1
    %v230 = vmax.f32 %v228, %v229
    %vm231 = vcmp.eq.f32.partialorder %v211, %v230
    %vm232 = vcmp.eq.f32.partialorder %v216, %v230
    %v233 = vsel %vm231, %v222, 16
    %v234 = vsel %vm232, %v223, 16
    %vm235 = vcmp.lt.s32.totalorder %v233, %v234
    %v236 = vsel %vm235, %v233, %v234
    %v237 = vrot.slane %v236, 4
    %vm238 = vcmp.lt.s32.totalorder %v236, %v237
    %v239 = vsel %vm238, %v236, %v237
    %v240 = vrot.slane %v239, 2
    %vm241 = vcmp.lt.s32.totalorder %v239, %v240
    %v242 = vsel %vm241, %v239, %v240
    %v243 = vrot.slane %v242, 1
    %vm244 = vcmp.lt.s32.totalorder %v242, %v243
    %v245 = vsel %vm244, %v242, %v243
    %vm246 = vcmp.eq.s32.totalorder %v222, %v245
    %vm247 = vcmp.eq.s32.totalorder %v223, %v245
    %v248 = vsel %vm246, 1.0, 0.0
    %v249 = vsel %vm247, 1.0, 0.0
    %250 = vst [vmem:[#allocation8] sm:$0xff] %v248
    %251 = vst [vmem:[#allocation8 + $0x8] sm:$0xff] %v249
    // Predicated region
    $region18: #{tpu_custom_call.1} parent=1 // pred_check
      _
    $region19: #{tpu_custom_call.1} parent=1 // pred_check_branch
      %253 = sbr.rel (0) target = $region21
    $region20: #{tpu_custom_call.1} parent=1 // pred_region
      %s255 = ssub.s32 256, 256
      %256 = vsyncadd [#allocation5], %s255
      %s257 = sshll.u32 [#allocation8], 4
      %s258 = int_to_ptr.vmem [resolvable:$true] %s257
      %263 = dma.vmem_to_hbm [thread:$0]  %s258, 256, %s2, [#allocation5], 128, 128, 8
    $region21: #{tpu_custom_call.1} parent=1 // pred_fallthru
      _
    // Predicated region
    $region22: #{tpu_custom_call.1} parent=1 // pred_check
      _
    $region23: #{tpu_custom_call.1} parent=1 // pred_check_branch
      %265 = sbr.rel (0) target = $region25
    $region24: #{tpu_custom_call.1} parent=1 // pred_region
      %s267 = ssub.s32 256, 256
      %268 = vsyncadd [#allocation10], %s267
      %s269 = sshll.u32 [#allocation9], 4
      %s270 = int_to_ptr.vmem [resolvable:$true] %s269
      %275 = dma.vmem_to_hbm [thread:$0]  %s270, 256, %s3, [#allocation10], 128, 128, 8
    $region25: #{tpu_custom_call.1} parent=1 // pred_fallthru
      _
    // Predicated region
    $region26: #{tpu_custom_call.1} parent=1 // pred_check
      _
    $region27: #{tpu_custom_call.1} parent=1 // pred_check_branch
      %277 = sbr.rel (0) target = $region29
    $region28: #{tpu_custom_call.1} parent=1 // pred_region
      %s279 = ssub.s32 16, 16
      %280 = vsyncadd [#allocation10], %s279
      %s282 = sshll.u32 [#allocation11], 4
      %s283 = int_to_ptr.vmem [resolvable:$true] %s282
      %285 = dma.vmem_to_hbm [thread:$0]  %s283, 16, %s4, [#allocation10]
    $region29: #{tpu_custom_call.1} parent=1 // pred_fallthru
      _
    // Predicated region
    $region30: #{tpu_custom_call.1} parent=1 // pred_check
      _
    $region31: #{tpu_custom_call.1} parent=1 // pred_check_branch
      %287 = sbr.rel (0) target = $region33
    $region32: #{tpu_custom_call.1} parent=1 // pred_region
      %288 = dma.done [#allocation5], 256
    $region33: #{tpu_custom_call.1} parent=1 // pred_fallthru
      _
    // Predicated region
    $region34: #{tpu_custom_call.1} parent=1 // pred_check
      _
    $region35: #{tpu_custom_call.1} parent=1 // pred_check_branch
      %290 = sbr.rel (0) target = $region37
    $region36: #{tpu_custom_call.1} parent=1 // pred_region
      %291 = dma.done [#allocation10], 256
    $region37: #{tpu_custom_call.1} parent=1 // pred_fallthru
      _
    // Predicated region
    $region38: #{tpu_custom_call.1} parent=1 // pred_check
      _
    $region39: #{tpu_custom_call.1} parent=1 // pred_check_branch
      %293 = sbr.rel (0) target = $region41
    $region40: #{tpu_custom_call.1} parent=1 // pred_region
      %294 = dma.done [#allocation10], 16
    $region41: #{tpu_custom_call.1} parent=1 // pred_fallthru
      _
    %295 = vsyncpa [#allocation4], 1
    %296 = vsyncpa [#allocation7], 1
    %297 = vsyncpa [#allocation5], 1
    %298 = vsyncpa [#allocation10], 1

</llo_original>
